<compile_context>
chip_gen: v7x
topology: tpu7x:2x2x1
jax: 0.10.0
libtpu: 0.0.40
codegen_flags: <defaults>
</compile_context>

<pallas_src>
import jax
import jax.numpy as jnp
from jax.experimental import pallas as pl
from jax.experimental.pallas import tpu as pltpu


def dueling_net_kernel(x_ref, w12_ref, b12_ref, wav_ref, bav_ref, q_ref):
    n_actions = q_ref.shape[1]

    # Cast activations to bf16 in-kernel (avoids a separate XLA cast op per
    # call and halves MXU passes); accumulate in f32 on the MXU.
    x = x_ref[...].astype(jnp.bfloat16)                                 # (B, S)

    # Stage 1 (fused fc1 | fc2): one matmul -> [h1 | h2], f32 epilogue.
    h = jnp.dot(x, w12_ref[...], preferred_element_type=jnp.float32)    # (B, 100)
    h = jnp.maximum(h + b12_ref[...], 0.0)

    # Stage 2 (fused outA | outV via block-diagonal weight): one matmul -> [a | v].
    av = jnp.dot(h.astype(jnp.bfloat16), wav_ref[...],
                 preferred_element_type=jnp.float32) + bav_ref[...]     # (B, A+1)

    a = av[:, :n_actions]                                               # (B, A)
    v = av[:, n_actions:]                                               # (B, 1)

    # torch.mean(a_value) with no dim => scalar mean over every element.
    q_ref[...] = v + (a - jnp.mean(a))


def fuse_params(p):
    """One-time weight prep (NOT on the hot path).

    Produces:
      w12 : (N_STATES, 2H)        bf16   [W1^T | W2^T]
      b12 : (1, 2H)               f32    [b1 | b2]
      wav : (2H, N_ACTIONS + 1)   bf16   block-diag [[WA^T, 0], [0, WV^T]]
      bav : (1, N_ACTIONS + 1)    f32    [bA | bV]
    """
    n_actions = p["outA_w"].shape[0]
    hidden = p["fc1_w"].shape[0]  # 50

    w12 = jnp.concatenate([p["fc1_w"].T, p["fc2_w"].T], axis=1)
    b12 = jnp.concatenate([p["fc1_b"], p["fc2_b"]])[None, :]

    wav = jnp.zeros((2 * hidden, n_actions + 1), jnp.float32)
    wav = wav.at[:hidden, :n_actions].set(p["outA_w"].T)
    wav = wav.at[hidden:, n_actions:].set(p["outV_w"].T)
    bav = jnp.concatenate([p["outA_b"], p["outV_b"]])[None, :]

    return dict(
        w12=w12.astype(jnp.bfloat16),
        b12=b12.astype(jnp.float32),
        wav=wav.astype(jnp.bfloat16),
        bav=bav.astype(jnp.float32),
    )


def dueling_net_forward(x, fused):
    """x: (B, N_STATES) float32.  fused: output of fuse_params (arrays only)."""
    B = x.shape[0]
    n_actions = fused["wav"].shape[1] - 1

    vmem = pl.BlockSpec(memory_space=pltpu.MemorySpace.VMEM)
    return pl.pallas_call(
        dueling_net_kernel,
        out_shape=jax.ShapeDtypeStruct((B, n_actions), jnp.float32),
        in_specs=[vmem] * 5,
        out_specs=vmem,
    )(x, fused["w12"], fused["b12"], fused["wav"], fused["bav"])


def init_params(key, n_states, n_actions):
    """Synthetic init mirroring the module: weights ~ N(0, 0.1); biases keep
    the PyTorch nn.Linear default U(-1/sqrt(fan_in), 1/sqrt(fan_in))."""
    ks = jax.random.split(key, 8)

    def lin(kw, kb, fan_in, fan_out):
        w = 0.1 * jax.random.normal(kw, (fan_out, fan_in), dtype=jnp.float32)
        bound = 1.0 / jnp.sqrt(float(fan_in))
        b = jax.random.uniform(kb, (fan_out,), dtype=jnp.float32,
                               minval=-bound, maxval=bound)
        return w, b

    fc1_w, fc1_b = lin(ks[0], ks[1], n_states, 50)
    outA_w, outA_b = lin(ks[2], ks[3], 50, n_actions)
    fc2_w, fc2_b = lin(ks[4], ks[5], n_states, 50)
    outV_w, outV_b = lin(ks[6], ks[7], 50, 1)

    return dict(fc1_w=fc1_w, fc1_b=fc1_b,
                outA_w=outA_w, outA_b=outA_b,
                fc2_w=fc2_w, fc2_b=fc2_b,
                outV_w=outV_w, outV_b=outV_b)


def reference_forward(x, p):
    """Pure-JAX f32 reference of the PyTorch forward."""
    h1 = jnp.maximum(x @ p["fc1_w"].T + p["fc1_b"], 0.0)
    a = h1 @ p["outA_w"].T + p["outA_b"]
    h2 = jnp.maximum(x @ p["fc2_w"].T + p["fc2_b"], 0.0)
    v = h2 @ p["outV_w"].T + p["outV_b"]
    return v + (a - jnp.mean(a))


if __name__ == "__main__":
    # Small shapes consistent with a gym-style env (CartPole-ish sizes).
    B = 8           # batch (replay minibatch / stacked env states)
    N_STATES = 16   # env.observation_space.shape[0]
    N_ACTIONS = 4   # env.action_space.n

    key = jax.random.PRNGKey(0)
    k_x, k_p = jax.random.split(key)

    x = jax.random.normal(k_x, (B, N_STATES), dtype=jnp.float32)
    params = init_params(k_p, N_STATES, N_ACTIONS)

    # One-time weight fusion (done outside the per-step hot path).
    fused = jax.tree_util.tree_map(jax.block_until_ready, fuse_params(params))

    fwd = jax.jit(dueling_net_forward)
    q = jax.block_until_ready(fwd(x, fused))

    q_ref = reference_forward(x, params)
    assert q.shape == (B, N_ACTIONS)
    # bf16 matmul operands (f32 accumulate) => loosened tolerance vs f32 ref.
    assert jnp.allclose(q, q_ref, atol=5e-2, rtol=5e-2), (
        f"max abs err {float(jnp.max(jnp.abs(q - q_ref)))}")

    print("KERNEL_OK")
</pallas_src>

<mosaic_0001>
module attributes {stable_mosaic.version = 11 : i64} {
  func.func @dueling_net_kernel(%arg0: memref<8x16xf32, #tpu.memory_space<vmem>>, %arg1: memref<16x100xbf16, #tpu.memory_space<vmem>>, %arg2: memref<1x100xf32, #tpu.memory_space<vmem>>, %arg3: memref<100x5xbf16, #tpu.memory_space<vmem>>, %arg4: memref<1x5xf32, #tpu.memory_space<vmem>>, %arg5: memref<8x4xf32, #tpu.memory_space<vmem>>) attributes {dimension_semantics = [], scalar_prefetch = 0 : i64, scratch_operands = 0 : i64, tpu.core_type = #tpu.core_type<tc>} {
    %c0 = arith.constant 0 : index
    %c0_0 = arith.constant 0 : index
    %0 = vector.load %arg0[%c0, %c0_0] : memref<8x16xf32, #tpu.memory_space<vmem>>, vector<8x16xf32>
    %1 = arith.truncf %0 : vector<8x16xf32> to vector<8x16xbf16>
    %c0_1 = arith.constant 0 : index
    %c0_2 = arith.constant 0 : index
    %2 = vector.load %arg1[%c0_1, %c0_2] : memref<16x100xbf16, #tpu.memory_space<vmem>>, vector<16x100xbf16>
    %cst = arith.constant dense<0.000000e+00> : vector<8x100xf32>
    %3 = tpu.matmul %1, %2, %cst {dimension_numbers = #tpu.dot_dimension_numbers<[1], [0], [0], [1], [0, 0, 1, 1], [], []>} : vector<8x16xbf16>, vector<16x100xbf16>, vector<8x100xf32> -> vector<8x100xf32>
    %c0_3 = arith.constant 0 : index
    %c0_4 = arith.constant 0 : index
    %4 = vector.load %arg2[%c0_3, %c0_4] : memref<1x100xf32, #tpu.memory_space<vmem>>, vector<1x100xf32>
    %5 = vector.broadcast %4 : vector<1x100xf32> to vector<8x100xf32>
    %6 = arith.addf %3, %5 : vector<8x100xf32>
    %cst_5 = arith.constant 0.000000e+00 : f32
    %7 = vector.broadcast %cst_5 : f32 to vector<8x100xf32>
    %8 = arith.maximumf %6, %7 : vector<8x100xf32>
    %9 = arith.truncf %8 : vector<8x100xf32> to vector<8x100xbf16>
    %c0_6 = arith.constant 0 : index
    %c0_7 = arith.constant 0 : index
    %10 = vector.load %arg3[%c0_6, %c0_7] : memref<100x5xbf16, #tpu.memory_space<vmem>>, vector<100x5xbf16>
    %cst_8 = arith.constant dense<0.000000e+00> : vector<8x5xf32>
    %11 = tpu.matmul %9, %10, %cst_8 {dimension_numbers = #tpu.dot_dimension_numbers<[1], [0], [0], [1], [0, 0, 1, 1], [], []>} : vector<8x100xbf16>, vector<100x5xbf16>, vector<8x5xf32> -> vector<8x5xf32>
    %c0_9 = arith.constant 0 : index
    %c0_10 = arith.constant 0 : index
    %12 = vector.load %arg4[%c0_9, %c0_10] : memref<1x5xf32, #tpu.memory_space<vmem>>, vector<1x5xf32>
    %13 = vector.broadcast %12 : vector<1x5xf32> to vector<8x5xf32>
    %14 = arith.addf %11, %13 : vector<8x5xf32>
    %15 = vector.extract_strided_slice %14 {offsets = [0, 0], sizes = [8, 4], strides = [1, 1]} : vector<8x5xf32> to vector<8x4xf32>
    %16 = vector.extract_strided_slice %14 {offsets = [0, 4], sizes = [8, 1], strides = [1, 1]} : vector<8x5xf32> to vector<8x1xf32>
    %17 = vector.shape_cast %15 : vector<8x4xf32> to vector<1x8x4xf32>
    %cst_11 = arith.constant dense<0.000000e+00> : vector<1xf32>
    %18 = vector.multi_reduction <add>, %17, %cst_11 [1, 2] : vector<1x8x4xf32> to vector<1xf32>
    %19 = vector.shape_cast %18 : vector<1xf32> to vector<1x1x1xf32>
    %20 = vector.extract %19[0, 0, 0] : f32 from vector<1x1x1xf32>
    %cst_12 = arith.constant 3.200000e+01 : f32
    %21 = arith.divf %20, %cst_12 : f32
    %22 = vector.broadcast %21 : f32 to vector<8x4xf32>
    %23 = arith.subf %15, %22 : vector<8x4xf32>
    %24 = vector.broadcast %16 : vector<8x1xf32> to vector<8x4xf32>
    %25 = arith.addf %24, %23 : vector<8x4xf32>
    %c0_13 = arith.constant 0 : index
    %c0_14 = arith.constant 0 : index
    %26 = vector.load %arg5[%c0_13, %c0_14] : memref<8x4xf32, #tpu.memory_space<vmem>>, vector<8x4xf32>
    tpu.vector_store %arg5[%c0_13, %c0_14], %25 {strides = array<i32>} : memref<8x4xf32, #tpu.memory_space<vmem>>, vector<8x4xf32>,
    return
  }
}

</mosaic_0001>

<llo_original>
// kernel: dueling_net_forward.1
$region0: #{dueling_net_forward.1}
  #allocation0 [shape = 'u32[]', space=smem, size = 0x4, offset = 0x4, fixed_abs, tag = 'smem constant byte address 0x4 - core index']
  #allocation1 [shape = 'u32[144,128]{1,0:T(1,128)}', space=vmem, size = 0x12000, scoped, tag = 'internal scratch']
  %s0 = inlined_call_operand.vmem [shape: f32[8,16], index: 0, kind: input, shape index: {}]
  %s1 = inlined_call_operand.vmem [shape: bf16[16,100], index: 1, kind: input, shape index: {}]
  %s2 = inlined_call_operand.vmem [shape: f32[1,100], index: 2, kind: input, shape index: {}]
  %s3 = inlined_call_operand.vmem [shape: bf16[100,5], index: 3, kind: input, shape index: {}]
  %s4 = inlined_call_operand.vmem [shape: f32[1,5], index: 4, kind: input, shape index: {}]
  %s5 = inlined_call_operand.vmem [shape: f32[8,4], index: 5, kind: output, shape index: {}]
  %s6 = sld [smem:[#allocation0]]
  $region30: #{dueling_net_forward.1} parent=0
    _
  %s8 = ssub.s32 1, %s6
  %s9 = scalar_select 0, %s8, %s6
  // Predicated region
  $region2: #{dueling_net_forward.1} parent=0 // pred_check
    _
  $region3: #{dueling_net_forward.1} parent=0 // pred_check_branch
    %11 = sbr.rel (0) target = $region5
  $region4: #{dueling_net_forward.1} parent=0 // pred_region
    _
  $region5: #{dueling_net_forward.1} parent=0 // pred_fallthru
    _
  // Predicated region
  $region6: #{dueling_net_forward.1} parent=0 // pred_check
    _
  $region7: #{dueling_net_forward.1} parent=0 // pred_check_branch
    %13 = sbr.rel (0) target = $region9
  $region8: #{dueling_net_forward.1} parent=0 // pred_region
    _
  $region9: #{dueling_net_forward.1} parent=0 // pred_fallthru
    _
  // Predicated region
  $region10: #{dueling_net_forward.1} parent=0 // pred_check
    _
  $region11: #{dueling_net_forward.1} parent=0 // pred_check_branch
    %15 = sbr.rel (0) target = $region13
  $region12: #{dueling_net_forward.1} parent=0 // pred_region
    _
  $region13: #{dueling_net_forward.1} parent=0 // pred_fallthru
    _
  // Predicated region
  $region14: #{dueling_net_forward.1} parent=0 // pred_check
    _
  $region15: #{dueling_net_forward.1} parent=0 // pred_check_branch
    %17 = sbr.rel (0) target = $region17
  $region16: #{dueling_net_forward.1} parent=0 // pred_region
    _
  $region17: #{dueling_net_forward.1} parent=0 // pred_fallthru
    _
  // Predicated region
  $region18: #{dueling_net_forward.1} parent=0 // pred_check
    _
  $region19: #{dueling_net_forward.1} parent=0 // pred_check_branch
    %19 = sbr.rel (0) target = $region21
  $region20: #{dueling_net_forward.1} parent=0 // pred_region
    _
  $region21: #{dueling_net_forward.1} parent=0 // pred_fallthru
    _
  %v21 = vld [vmem:[%s0] sm:$0xff]
  %v22 = vpack.c.bf16 %v21, %v21
  %v23 = vld [vmem:[%s1] sm:$0xf]
  %v24 = vld [vmem:[%s1 + $0x4] sm:$0xf]
  %v25 = vld [vmem:[%s2] sm:$0x1]
  %v27 = vlaneseq
  %v28 = vshrl.u32 %v27, 7
  %v29 = vsub.s32 0, %v28
  %v30 = vrot.slane %v25, %v29
  %v34 = vunpack.c.l.b16 %v23
  %v35 = vunpack.c.l.b16 %v24
  %v36 = vpack.c.b16 %v35, %v34
  %vm38 = vcmask 130048
  %v40 = vsel %vm38, %v22, 0
  %42 = vmatprep.subr.bf16.mxu0 0
  %43 = vmatpush1.bf16.msra.mxu0 %v36
  %44 = vmatprep.subr.bf16.mxu0 0
  %45 = vmatpush1.bf16.msra.mxu0 0
  %46 = vmatprep.subr.bf16.mxu0 0
  %47 = vmatpush1.bf16.msra.mxu0 0
  %48 = vmatprep.subr.bf16.mxu0 0
  %49 = vmatpush1.bf16.msra.mxu0 0
  %50 = vmatprep.subr.bf16.mxu0 0
  %51 = vmatpush1.bf16.msra.mxu0 0
  %52 = vmatprep.subr.bf16.mxu0 0
  %53 = vmatpush1.bf16.msra.mxu0 0
  %54 = vmatprep.subr.bf16.mxu0 0
  %55 = vmatpush1.bf16.msra.mxu0 0
  %56 = vmatprep.subr.bf16.mxu0 0
  %57 = vmatpush1.bf16.msra.mxu0 0
  %58 = vmatprep.subr.bf16.mxu0 0
  %59 = vmatpush1.bf16.msra.mxu0 0
  %60 = vmatprep.subr.bf16.mxu0 0
  %61 = vmatpush1.bf16.msra.mxu0 0
  %62 = vmatprep.subr.bf16.mxu0 0
  %63 = vmatpush1.bf16.msra.mxu0 0
  %64 = vmatprep.subr.bf16.mxu0 0
  %65 = vmatpush1.bf16.msra.mxu0 0
  %66 = vmatprep.subr.bf16.mxu0 0
  %67 = vmatpush1.bf16.msra.mxu0 0
  %68 = vmatprep.subr.bf16.mxu0 0
  %69 = vmatpush1.bf16.msra.mxu0 0
  %70 = vmatprep.subr.bf16.mxu0 0
  %71 = vmatpush1.bf16.msra.mxu0 0
  %72 = vmatprep.subr.bf16.mxu0 0
  %73 = vmatpush1.bf16.msra.mxu0 0
  %74 = vmatprep.mubr.bf16.mxu0 0
  %75 = vmatmul.mubr.bf16.gmra.mrb[0].mxu0 %v40
  %v76 = vpop.f32.mrb[0].mxu0
  %v77 = vadd.f32 %v30, %v76
  %v78 = vpop.f32.mrb[0].mxu0
  %v79 = vpop.f32.mrb[0].mxu0
  %v80 = vpop.f32.mrb[0].mxu0
  %81 = vdwg.mxu0
  %v82 = vmax.f32 %v77, 0.0
  %v83 = vpack.c.bf16 %v82, %v82
  %v84 = vld [vmem:[%s3] sm:$0xf]
  %v85 = vld [vmem:[%s3 + $0x4] sm:$0xf]
  %v86 = vld [vmem:[%s3 + $0x8] sm:$0xf]
  %v87 = vld [vmem:[%s3 + $0xc] sm:$0xf]
  %v88 = vld [vmem:[%s3 + $0x10] sm:$0xf]
  %v89 = vld [vmem:[%s3 + $0x14] sm:$0xf]
  %v90 = vld [vmem:[%s3 + $0x18] sm:$0xf]
  %v91 = vld [vmem:[%s3 + $0x1c] sm:$0xf]
  %v92 = vld [vmem:[%s3 + $0x20] sm:$0xf]
  %v93 = vld [vmem:[%s3 + $0x24] sm:$0xf]
  %v94 = vld [vmem:[%s3 + $0x28] sm:$0xf]
  %v95 = vld [vmem:[%s3 + $0x2c] sm:$0xf]
  %v96 = vld [vmem:[%s3 + $0x30] sm:$0x3]
  %v97 = vld [vmem:[%s4] sm:$0x1]
  %v99 = vlaneseq
  %v100 = vshrl.u32 %v99, 7
  %v101 = vsub.s32 0, %v100
  %v102 = vrot.slane %v97, %v101
  %v117 = vunpack.c.l.b16 %v84
  %v118 = vunpack.c.l.b16 %v85
  %v119 = vunpack.c.l.b16 %v86
  %v120 = vunpack.c.l.b16 %v87
  %v121 = vunpack.c.l.b16 %v88
  %v122 = vunpack.c.l.b16 %v89
  %v123 = vunpack.c.l.b16 %v90
  %v124 = vunpack.c.l.b16 %v91
  %v125 = vunpack.c.l.b16 %v92
  %v126 = vunpack.c.l.b16 %v93
  %v127 = vunpack.c.l.b16 %v94
  %v128 = vunpack.c.l.b16 %v95
  %v129 = vunpack.c.l.b16 %v96
  %v130 = vpack.c.b16 %v118, %v117
  %v131 = vpack.c.b16 %v120, %v119
  %v132 = vpack.c.b16 %v122, %v121
  %v133 = vpack.c.b16 %v124, %v123
  %v134 = vpack.c.b16 %v126, %v125
  %v135 = vpack.c.b16 %v128, %v127
  %v136 = vpack.c.b16 %v129, %v129
  %vm143 = vcmask 818176
  %v145 = vsel %vm143, %v83, 0
  %vm147 = vcmask 1041408
  %v149 = vsel %vm147, %v136, 0
  %151 = vmatprep.subr.bf16.mxu0 0
  %152 = vmatpush1.bf16.msra.mxu0 %v130
  %153 = vmatprep.subr.bf16.mxu0 0
  %154 = vmatpush1.bf16.msra.mxu0 %v131
  %155 = vmatprep.subr.bf16.mxu0 0
  %156 = vmatpush1.bf16.msra.mxu0 %v132
  %157 = vmatprep.subr.bf16.mxu0 0
  %158 = vmatpush1.bf16.msra.mxu0 %v133
  %159 = vmatprep.subr.bf16.mxu0 0
  %160 = vmatpush1.bf16.msra.mxu0 %v134
  %161 = vmatprep.subr.bf16.mxu0 0
  %162 = vmatpush1.bf16.msra.mxu0 %v135
  %163 = vmatprep.subr.bf16.mxu0 0
  %164 = vmatpush1.bf16.msra.mxu0 %v149
  %165 = vmatprep.subr.bf16.mxu0 0
  %166 = vmatpush1.bf16.msra.mxu0 0
  %167 = vmatprep.subr.bf16.mxu0 0
  %168 = vmatpush1.bf16.msra.mxu0 0
  %169 = vmatprep.subr.bf16.mxu0 0
  %170 = vmatpush1.bf16.msra.mxu0 0
  %171 = vmatprep.subr.bf16.mxu0 0
  %172 = vmatpush1.bf16.msra.mxu0 0
  %173 = vmatprep.subr.bf16.mxu0 0
  %174 = vmatpush1.bf16.msra.mxu0 0
  %175 = vmatprep.subr.bf16.mxu0 0
  %176 = vmatpush1.bf16.msra.mxu0 0
  %177 = vmatprep.subr.bf16.mxu0 0
  %178 = vmatpush1.bf16.msra.mxu0 0
  %179 = vmatprep.subr.bf16.mxu0 0
  %180 = vmatpush1.bf16.msra.mxu0 0
  %181 = vmatprep.subr.bf16.mxu0 0
  %182 = vmatpush1.bf16.msra.mxu0 0
  %183 = vmatprep.mubr.bf16.mxu0 0
  %184 = vmatmul.mubr.bf16.gmra.mrb[0].mxu0 %v145
  %v185 = vpop.f32.mrb[0].mxu0
  %v186 = vadd.f32 %v102, %v185
  %v187 = vpop.f32.mrb[0].mxu0
  %v188 = vpop.f32.mrb[0].mxu0
  %v189 = vpop.f32.mrb[0].mxu0
  %190 = vdwg.mxu0
  %vm191 = vcmask 31744
  %v192 = vsel %vm191, %v186, 0.0
  %193 = vadd.xlane.f32.xlu0 %v192
  %v194 = vpop.xlane.xlu0 %193
  %v195 = vrot.slane %v194, 4
  %v196 = vadd.f32 %v194, %v195
  %v197 = vrot.slane %v196, 2
  %v198 = vadd.f32 %v196, %v197
  %v199 = vrot.slane %v198, 1
  %v200 = vadd.f32 %v198, %v199
  %s201 = vtos %v200
  %v202 = vrcp.pop 32.0
  %s203 = vtos %v202
  %s204 = smul.f32 %s201, %s203
  %v205 = vstv %s204
  %v206 = vsub.f32 %v186, %v205
  %208 = vset.pattern.permute.xlu0 4
  %209 = vperm.xlu0 %208, %v186
  %v210 = vpop.permute.xlu0 %209
  %v212 = vadd.f32 %v210, %v206
  %213 = vst.msk [vmem:[%s5] sm:$0xff] %vm191, %v212
  // Predicated region
  $region22: #{dueling_net_forward.1} parent=0 // pred_check
    _
  $region23: #{dueling_net_forward.1} parent=0 // pred_check_branch
    %215 = sbr.rel (0) target = $region25
  $region24: #{dueling_net_forward.1} parent=0 // pred_region
    _
  $region25: #{dueling_net_forward.1} parent=0 // pred_fallthru
    _
  // Predicated region
  $region26: #{dueling_net_forward.1} parent=0 // pred_check
    _
  $region27: #{dueling_net_forward.1} parent=0 // pred_check_branch
    %217 = sbr.rel (0) target = $region29
  $region28: #{dueling_net_forward.1} parent=0 // pred_region
    _
  $region29: #{dueling_net_forward.1} parent=0 // pred_fallthru
    _

</llo_original>
